<compile_context>
chip_gen: v6e
topology: v6e:2x2x1
jax: 0.10.0
libtpu: 0.0.40
codegen_flags: <defaults>
</compile_context>

<pallas_src>
import math

import jax
import jax.numpy as jnp
from jax import lax
from jax.experimental import pallas as pl
from jax.experimental.pallas import tpu as pltpu


def _attn_body(x_ref, wqkv_ref, wo_ref, bqkv_ref, bo_ref,
               out_ref, attnw_ref, acc_ref, *, group_size, head_dim):
    """One grid step = one (batch, head-group) pair.

    x_ref     : (1, S, E)            input dtype (re-fetched only when b changes)
    wqkv_ref  : (Hg, E, 3*G*Dh)      input dtype, VMEM-resident (constant index_map)
    wo_ref    : (Hg, G*Dh, E)        input dtype, VMEM-resident
    bqkv_ref  : (Hg, 1, 3*G*Dh)      f32,        VMEM-resident
    bo_ref    : (1, E)               f32,        VMEM-resident
    out_ref   : (1, S, E)            written at the last head-group
    attnw_ref : (1, G, S, S) or None
    acc_ref   : (S, E) f32 VMEM scratch, persists across the head-group axis
    """
    grp = pl.program_id(1)
    last_grp = pl.num_programs(1) - 1
    cdt = x_ref.dtype                      # MXU operand dtype (bf16 in -> bf16 MXU)
    GD = group_size * head_dim

    x = x_ref[0]                                                        # (S, E)
    wqkv = wqkv_ref[grp]                                                # (E, 3*GD)
    bqkv = bqkv_ref[grp]                                                # (1, 3*GD) f32

    # Fused group QKV projection: full-E contraction, 3*G*Dh-wide output.
    # (softmax scale is already folded into the Wq columns / bq.)
    qkv = jnp.dot(x, wqkv, preferred_element_type=jnp.float32) + bqkv   # (S, 3*GD) f32

    # Group segments split at G*Dh multiples (lane-aligned when G*Dh % 128 == 0).
    q_g = qkv[:, 0 * GD:1 * GD]
    k_g = qkv[:, 1 * GD:2 * GD]
    v_g = qkv[:, 2 * GD:3 * GD]

    pv_parts = []
    for h in range(group_size):                      # static unrolled loop over heads
        lo, hi = h * head_dim, (h + 1) * head_dim
        q_h = q_g[:, lo:hi].astype(cdt)              # (S, Dh)
        k_h = k_g[:, lo:hi].astype(cdt)
        v_h = v_g[:, lo:hi].astype(cdt)

        # q @ k^T via the transposed-operand MXU path (no materialized transpose).
        scores = lax.dot_general(
            q_h, k_h, dimension_numbers=(((1,), (1,)), ((), ())),
            preferred_element_type=jnp.float32)       # (S, S) f32

        m = jnp.max(scores, axis=-1, keepdims=True)
        p = jnp.exp(scores - m)
        denom = jnp.sum(p, axis=-1, keepdims=True)
        if attnw_ref is not None:
            # Exact normalization so the returned attention weights sum to 1.
            p = p / denom
            attnw_ref[0, h] = p.astype(attnw_ref.dtype)
        else:
            # Perf path: EUP vrcp (approx reciprocal), free bundle slot.
            p = p * pl.reciprocal(denom, approx=True)
        # TODO(synk): attention_dropout is 0 in this config (and the PyTorch
        # `nn.functional(...)` dropout call is itself a no-op/bug), so dropout
        # is intentionally not implemented.

        pv_parts.append(jnp.dot(p.astype(cdt), v_h,
                                preferred_element_type=jnp.float32))    # (S, Dh) f32

    # Assemble the group context once and run ONE wide output-projection matmul
    # (contraction width G*Dh instead of Dh).
    if group_size > 1:
        pv_g = jnp.concatenate(pv_parts, axis=-1).astype(cdt)           # (S, GD)
    else:
        pv_g = pv_parts[0].astype(cdt)
    contrib = jnp.dot(pv_g, wo_ref[grp],
                      preferred_element_type=jnp.float32)               # (S, E) f32

    @pl.when(grp == 0)
    def _():
        acc_ref[...] = contrib

    @pl.when(grp != 0)
    def _():
        acc_ref[...] += contrib

    @pl.when(grp == last_grp)
    def _():
        out_ref[0] = (acc_ref[...] + bo_ref[...]).astype(out_ref.dtype)


def _make_kernel(group_size, head_dim, output_attentions):
    if output_attentions:
        def kernel(x, wqkv, wo, bqkv, bo, out, attnw, acc):
            _attn_body(x, wqkv, wo, bqkv, bo, out, attnw, acc,
                       group_size=group_size, head_dim=head_dim)
    else:
        def kernel(x, wqkv, wo, bqkv, bo, out, acc):
            _attn_body(x, wqkv, wo, bqkv, bo, out, None, acc,
                       group_size=group_size, head_dim=head_dim)
    return kernel


def _auto_group_size(nb_heads, head_dim):
    # Largest divisor of nb_heads whose G*Dh <= 256 (fills the MXU K dim on
    # v6e/v7x; still a big improvement over Dh on v5e).
    best = 1
    for g in range(1, nb_heads + 1):
        if nb_heads % g == 0 and g * head_dim <= 256:
            best = g
    return best


def pack_siglip_attention_params(params, *, nb_heads, group_size, param_dtype):
    """One-time repack of PyTorch-layout Linear weights (hoisted out of the call path)."""
    E = params["wq"].shape[0]
    assert E % nb_heads == 0
    Dh = E // nb_heads
    assert nb_heads % group_size == 0, "group_size must divide nb_heads"
    G = group_size
    Hg = nb_heads // G
    GD = G * Dh
    scale = 1.0 / math.sqrt(Dh)          # folded into Wq / bq (exact, free at runtime)

    def cols_per_group(w, s=1.0):
        # (out, in) -> (in, out) -> (in, Hg, G*Dh) -> (Hg, in, G*Dh)
        wt = (w * s).T.reshape(E, Hg, GD)
        return jnp.transpose(wt, (1, 0, 2))

    wqkv = jnp.concatenate(
        [cols_per_group(params["wq"], scale),
         cols_per_group(params["wk"]),
         cols_per_group(params["wv"])],
        axis=-1).astype(param_dtype)                               # (Hg, E, 3*GD)

    bqkv = jnp.concatenate(
        [(params["bq"] * scale).reshape(Hg, 1, GD),
         params["bk"].reshape(Hg, 1, GD),
         params["bv"].reshape(Hg, 1, GD)],
        axis=-1).astype(jnp.float32)                               # (Hg, 1, 3*GD)

    woT = params["wo"].T.reshape(Hg, GD, E).astype(param_dtype)    # (Hg, GD, E)
    bo = params["bo"].reshape(1, E).astype(jnp.float32)            # (1, E)

    return {"wqkv": wqkv, "wo": woT, "bqkv": bqkv, "bo": bo,
            "nb_heads": nb_heads, "group_size": G, "head_dim": Dh}


def siglip_attention_packed(hidden_states, packed, *, output_attentions=True,
                            attn_weights_dtype=None):
    B, S, E = hidden_states.shape
    H = packed["nb_heads"]
    G = packed["group_size"]
    Dh = packed["head_dim"]
    Hg = H // G
    GD = G * Dh
    dtype = hidden_states.dtype
    if attn_weights_dtype is None:
        attn_weights_dtype = dtype                 # PyTorch: attn_weights cast to Q.dtype

    wqkv = packed["wqkv"].astype(dtype)
    wo = packed["wo"].astype(dtype)
    bqkv = packed["bqkv"]
    bo = packed["bo"]

    kernel = _make_kernel(G, Dh, output_attentions)

    out_shapes = [jax.ShapeDtypeStruct((B, S, E), dtype)]
    out_specs = [pl.BlockSpec((1, S, E), lambda b, g: (b, 0, 0))]
    if output_attentions:
        out_shapes.append(jax.ShapeDtypeStruct((B, H, S, S), attn_weights_dtype))
        out_specs.append(pl.BlockSpec((1, G, S, S), lambda b, g: (b, g, 0, 0)))

    results = pl.pallas_call(
        kernel,
        out_shape=tuple(out_shapes),
        grid_spec=pltpu.PrefetchScalarGridSpec(
            num_scalar_prefetch=0,
            # Head-group axis innermost and "arbitrary" (accumulator + shared
            # output tile).  Batch axis "parallel" for megacore.
            grid=(B, Hg),
            in_specs=[
                # x: block index depends only on b -> fetched once per batch element.
                pl.BlockSpec((1, S, E), lambda b, g: (b, 0, 0)),
                # Grid-invariant, VMEM-resident weight operands (fetched once
                # per launch; head-group selected inside the kernel).
                pl.BlockSpec((Hg, E, 3 * GD), lambda b, g: (0, 0, 0)),
                pl.BlockSpec((Hg, GD, E), lambda b, g: (0, 0, 0)),
                pl.BlockSpec((Hg, 1, 3 * GD), lambda b, g: (0, 0, 0)),
                pl.BlockSpec((1, E), lambda b, g: (0, 0)),
            ],
            out_specs=tuple(out_specs),
            scratch_shapes=[pltpu.VMEM((S, E), jnp.float32)],
        ),
        compiler_params=pltpu.CompilerParams(
            dimension_semantics=("parallel", "arbitrary")),
    )(hidden_states, wqkv, wo, bqkv, bo)

    out = results[0]
    attnw = results[1] if output_attentions else None
    return out, attnw


def siglip_attention(hidden_states, params, *, nb_heads, group_size=None,
                     output_attentions=True, attn_weights_dtype=None):
    """Convenience wrapper: packs params then calls the kernel.  For repeated
    calls with the same parameters, pack once with pack_siglip_attention_params
    and call siglip_attention_packed directly (avoids the O(E^2) repack)."""
    E = hidden_states.shape[-1]
    assert E % nb_heads == 0
    Dh = E // nb_heads
    if group_size is None:
        group_size = _auto_group_size(nb_heads, Dh)
    packed = pack_siglip_attention_params(params, nb_heads=nb_heads,
                                          group_size=group_size,
                                          param_dtype=hidden_states.dtype)
    return siglip_attention_packed(hidden_states, packed,
                                   output_attentions=output_attentions,
                                   attn_weights_dtype=attn_weights_dtype)


def reference_attention(x, params, *, nb_heads):
    """Pure-JAX reference mirroring the PyTorch forward (highest precision)."""
    B, S, E = x.shape
    Dh = E // nb_heads
    hp = lax.Precision.HIGHEST
    q = jnp.dot(x, params["wq"].T, precision=hp) + params["bq"]
    k = jnp.dot(x, params["wk"].T, precision=hp) + params["bk"]
    v = jnp.dot(x, params["wv"].T, precision=hp) + params["bv"]
    q = q.reshape(B, S, nb_heads, Dh).transpose(0, 2, 1, 3)
    k = k.reshape(B, S, nb_heads, Dh).transpose(0, 2, 1, 3)
    v = v.reshape(B, S, nb_heads, Dh).transpose(0, 2, 1, 3)
    scores = jnp.einsum("bhqd,bhkd->bhqk", q, k, precision=hp) / math.sqrt(Dh)
    p = jax.nn.softmax(scores.astype(jnp.float32), axis=-1).astype(q.dtype)
    ctx = jnp.einsum("bhqk,bhkd->bhqd", p, v, precision=hp)
    ctx = ctx.transpose(0, 2, 1, 3).reshape(B, S, E)
    return jnp.dot(ctx, params["wo"].T, precision=hp) + params["bo"], p


if __name__ == "__main__":
    def make_params(key, E):
        keys = jax.random.split(key, 8)
        w = 0.05
        return {
            "wq": w * jax.random.normal(keys[0], (E, E), jnp.float32),
            "wk": w * jax.random.normal(keys[1], (E, E), jnp.float32),
            "wv": w * jax.random.normal(keys[2], (E, E), jnp.float32),
            "wo": w * jax.random.normal(keys[3], (E, E), jnp.float32),
            "bq": w * jax.random.normal(keys[4], (E,), jnp.float32),
            "bk": w * jax.random.normal(keys[5], (E,), jnp.float32),
            "bv": w * jax.random.normal(keys[6], (E,), jnp.float32),
            "bo": w * jax.random.normal(keys[7], (E,), jnp.float32),
        }

    key = jax.random.PRNGKey(0)
    kp1, kx1, kp2, kx2 = jax.random.split(key, 4)

    # ---- Small config (SiglipVisionConfig scaled down): hidden=32, heads=4 ----
    B, S, E, H = 2, 8, 32, 4
    params = make_params(kp1, E)
    x = jax.random.normal(kx1, (B, S, E), jnp.float32)
    ref_out, ref_p = reference_attention(x, params, nb_heads=H)

    # f32, with attention weights (matches the PyTorch return tuple).
    out, attnw = siglip_attention(x, params, nb_heads=H, group_size=2,
                                  output_attentions=True)
    out = jax.block_until_ready(out)
    attnw = jax.block_until_ready(attnw)
    assert jnp.allclose(out, ref_out, atol=5e-3, rtol=5e-3), "f32 output mismatch"
    assert jnp.allclose(attnw, ref_p, atol=5e-3, rtol=5e-3), "f32 attn_weights mismatch"

    # f32, perf path (no attention-weights writeback).
    out_na, attnw_na = siglip_attention(x, params, nb_heads=H, group_size=2,
                                        output_attentions=False)
    out_na = jax.block_until_ready(out_na)
    assert attnw_na is None
    assert jnp.allclose(out_na, ref_out, atol=5e-3, rtol=5e-3), "no-attnw output mismatch"

    # bf16 path: bf16 MXU operands, f32 accumulation, bf16 attn-weight storage.
    x_bf16 = x.astype(jnp.bfloat16)
    out_bf, attnw_bf = siglip_attention(x_bf16, params, nb_heads=H, group_size=2,
                                        output_attentions=True,
                                        attn_weights_dtype=jnp.bfloat16)
    out_bf = jax.block_until_ready(out_bf)
    assert jnp.allclose(out_bf.astype(jnp.float32), ref_out,
                        atol=3e-2, rtol=3e-2), "bf16 output mismatch"
    assert jnp.allclose(attnw_bf.astype(jnp.float32), ref_p,
                        atol=3e-2, rtol=3e-2), "bf16 attn_weights mismatch"

    # ---- Larger config exercising multi-(8,128)-tile layouts with a lane-aligned
    #      head group (G*Dh = 128) and pre-packed (hoisted) parameters. ----
    B2, S2, E2, H2 = 2, 256, 256, 8
    params2 = make_params(kp2, E2)
    x2 = jax.random.normal(kx2, (B2, S2, E2), jnp.float32)
    ref_out2, ref_p2 = reference_attention(x2, params2, nb_heads=H2)

    packed2 = pack_siglip_attention_params(params2, nb_heads=H2, group_size=4,
                                           param_dtype=jnp.float32)
    out2, attnw2 = siglip_attention_packed(x2, packed2, output_attentions=True)
    out2 = jax.block_until_ready(out2)
    attnw2 = jax.block_until_ready(attnw2)
    assert jnp.allclose(out2, ref_out2, atol=2e-2, rtol=2e-2), "large output mismatch"
    assert jnp.allclose(attnw2, ref_p2, atol=2e-2, rtol=2e-2), "large attn_weights mismatch"

    out2_na, _ = siglip_attention_packed(x2, packed2, output_attentions=False)
    out2_na = jax.block_until_ready(out2_na)
    assert jnp.allclose(out2_na, ref_out2, atol=2e-2, rtol=2e-2), "large no-attnw mismatch"

    print("KERNEL_OK")
</pallas_src>

<mosaic_0001>
module attributes {stable_mosaic.version = 11 : i64} {
  func.func @kernel(%arg0: i32, %arg1: i32, %arg2: memref<1x8x32xf32, #tpu.memory_space<vmem>>, %arg3: memref<2x32x48xf32, #tpu.memory_space<vmem>>, %arg4: memref<2x16x32xf32, #tpu.memory_space<vmem>>, %arg5: memref<2x1x48xf32, #tpu.memory_space<vmem>>, %arg6: memref<1x32xf32, #tpu.memory_space<vmem>>, %arg7: memref<1x8x32xf32, #tpu.memory_space<vmem>>, %arg8: memref<1x2x8x8xf32, #tpu.memory_space<vmem>>, %arg9: memref<8x32xf32, #tpu.memory_space<vmem>>) attributes {dimension_semantics = [#tpu.dimension_semantics<parallel>, #tpu.dimension_semantics<arbitrary>], iteration_bounds = array<i64: 2, 2>, scalar_prefetch = 0 : i64, scratch_operands = 1 : i64, tpu.core_type = #tpu.core_type<tc>, window_params = [{transform_indices = @transform_0, window_bounds = array<i64: 1, 8, 32>}, {pipeline_mode = #tpu.pipeline_mode<synchronous>, transform_indices = @transform_1, window_bounds = array<i64: 2, 32, 48>}, {pipeline_mode = #tpu.pipeline_mode<synchronous>, transform_indices = @transform_2, window_bounds = array<i64: 2, 16, 32>}, {pipeline_mode = #tpu.pipeline_mode<synchronous>, transform_indices = @transform_3, window_bounds = array<i64: 2, 1, 48>}, {pipeline_mode = #tpu.pipeline_mode<synchronous>, transform_indices = @transform_4, window_bounds = array<i64: 1, 32>}, {transform_indices = @transform_5, window_bounds = array<i64: 1, 8, 32>}, {transform_indices = @transform_6, window_bounds = array<i64: 1, 2, 8, 8>}]} {
    %c0 = arith.constant 0 : index
    %c0_0 = arith.constant 0 : index
    %c0_1 = arith.constant 0 : index
    %0 = vector.load %arg2[%c0, %c0_0, %c0_1] : memref<1x8x32xf32, #tpu.memory_space<vmem>>, vector<1x8x32xf32>
    %1 = vector.shape_cast %0 : vector<1x8x32xf32> to vector<8x32xf32>
    %2 = arith.index_cast %arg1 : i32 to index
    %c0_2 = arith.constant 0 : index
    %c0_3 = arith.constant 0 : index
    %3 = vector.load %arg3[%2, %c0_2, %c0_3] : memref<2x32x48xf32, #tpu.memory_space<vmem>>, vector<1x32x48xf32>
    %4 = vector.shape_cast %3 : vector<1x32x48xf32> to vector<32x48xf32>
    %5 = arith.index_cast %arg1 : i32 to index
    %c0_4 = arith.constant 0 : index
    %c0_5 = arith.constant 0 : index
    %6 = vector.load %arg5[%5, %c0_4, %c0_5] : memref<2x1x48xf32, #tpu.memory_space<vmem>>, vector<1x1x48xf32>
    %7 = vector.shape_cast %6 : vector<1x1x48xf32> to vector<1x48xf32>
    %cst = arith.constant dense<0.000000e+00> : vector<8x48xf32>
    %8 = tpu.matmul %1, %4, %cst {dimension_numbers = #tpu.dot_dimension_numbers<[1], [0], [0], [1], [0, 0, 1, 1], [], []>} : vector<8x32xf32>, vector<32x48xf32>, vector<8x48xf32> -> vector<8x48xf32>
    %9 = vector.broadcast %7 : vector<1x48xf32> to vector<8x48xf32>
    %10 = arith.addf %8, %9 : vector<8x48xf32>
    %11 = vector.extract_strided_slice %10 {offsets = [0, 0], sizes = [8, 16], strides = [1, 1]} : vector<8x48xf32> to vector<8x16xf32>
    %12 = vector.extract_strided_slice %10 {offsets = [0, 16], sizes = [8, 16], strides = [1, 1]} : vector<8x48xf32> to vector<8x16xf32>
    %13 = vector.extract_strided_slice %10 {offsets = [0, 32], sizes = [8, 16], strides = [1, 1]} : vector<8x48xf32> to vector<8x16xf32>
    %14 = vector.extract_strided_slice %11 {offsets = [0, 0], sizes = [8, 8], strides = [1, 1]} : vector<8x16xf32> to vector<8x8xf32>
    %15 = vector.extract_strided_slice %12 {offsets = [0, 0], sizes = [8, 8], strides = [1, 1]} : vector<8x16xf32> to vector<8x8xf32>
    %16 = vector.extract_strided_slice %13 {offsets = [0, 0], sizes = [8, 8], strides = [1, 1]} : vector<8x16xf32> to vector<8x8xf32>
    %cst_6 = arith.constant dense<0.000000e+00> : vector<8x8xf32>
    %17 = tpu.matmul %14, %15, %cst_6 {dimension_numbers = #tpu.dot_dimension_numbers<[1], [1], [0], [0], [0, 0, 1, 0], [], []>} : vector<8x8xf32>, vector<8x8xf32>, vector<8x8xf32> -> vector<8x8xf32>
    %cst_7 = arith.constant dense<0xFF800000> : vector<8xf32>
    %18 = vector.multi_reduction <maximumf>, %17, %cst_7 [1] : vector<8x8xf32> to vector<8xf32>
    %19 = vector.shape_cast %18 : vector<8xf32> to vector<8x1xf32>
    %20 = vector.broadcast %19 : vector<8x1xf32> to vector<8x8xf32>
    %21 = arith.subf %17, %20 : vector<8x8xf32>
    %22 = math.exp %21 : vector<8x8xf32>
    %cst_8 = arith.constant dense<0.000000e+00> : vector<8xf32>
    %23 = vector.multi_reduction <add>, %22, %cst_8 [1] : vector<8x8xf32> to vector<8xf32>
    %24 = vector.shape_cast %23 : vector<8xf32> to vector<8x1xf32>
    %25 = vector.broadcast %24 : vector<8x1xf32> to vector<8x8xf32>
    %26 = arith.divf %22, %25 : vector<8x8xf32>
    %c0_9 = arith.constant 0 : index
    %c0_10 = arith.constant 0 : index
    %c0_11 = arith.constant 0 : index
    %c0_12 = arith.constant 0 : index
    %27 = vector.load %arg8[%c0_9, %c0_10, %c0_11, %c0_12] : memref<1x2x8x8xf32, #tpu.memory_space<vmem>>, vector<1x1x8x8xf32>
    %28 = vector.shape_cast %27 : vector<1x1x8x8xf32> to vector<8x8xf32>
    %29 = vector.shape_cast %26 : vector<8x8xf32> to vector<1x1x8x8xf32>
    tpu.vector_store %arg8[%c0_9, %c0_10, %c0_11, %c0_12], %29 {strides = array<i32>} : memref<1x2x8x8xf32, #tpu.memory_space<vmem>>, vector<1x1x8x8xf32>,
    %cst_13 = arith.constant dense<0.000000e+00> : vector<8x8xf32>
    %30 = tpu.matmul %26, %16, %cst_13 {dimension_numbers = #tpu.dot_dimension_numbers<[1], [0], [0], [1], [0, 0, 1, 1], [], []>} : vector<8x8xf32>, vector<8x8xf32>, vector<8x8xf32> -> vector<8x8xf32>
    %31 = vector.extract_strided_slice %11 {offsets = [0, 8], sizes = [8, 8], strides = [1, 1]} : vector<8x16xf32> to vector<8x8xf32>
    %32 = vector.extract_strided_slice %12 {offsets = [0, 8], sizes = [8, 8], strides = [1, 1]} : vector<8x16xf32> to vector<8x8xf32>
    %33 = vector.extract_strided_slice %13 {offsets = [0, 8], sizes = [8, 8], strides = [1, 1]} : vector<8x16xf32> to vector<8x8xf32>
    %cst_14 = arith.constant dense<0.000000e+00> : vector<8x8xf32>
    %34 = tpu.matmul %31, %32, %cst_14 {dimension_numbers = #tpu.dot_dimension_numbers<[1], [1], [0], [0], [0, 0, 1, 0], [], []>} : vector<8x8xf32>, vector<8x8xf32>, vector<8x8xf32> -> vector<8x8xf32>
    %cst_15 = arith.constant dense<0xFF800000> : vector<8xf32>
    %35 = vector.multi_reduction <maximumf>, %34, %cst_15 [1] : vector<8x8xf32> to vector<8xf32>
    %36 = vector.shape_cast %35 : vector<8xf32> to vector<8x1xf32>
    %37 = vector.broadcast %36 : vector<8x1xf32> to vector<8x8xf32>
    %38 = arith.subf %34, %37 : vector<8x8xf32>
    %39 = math.exp %38 : vector<8x8xf32>
    %cst_16 = arith.constant dense<0.000000e+00> : vector<8xf32>
    %40 = vector.multi_reduction <add>, %39, %cst_16 [1] : vector<8x8xf32> to vector<8xf32>
    %41 = vector.shape_cast %40 : vector<8xf32> to vector<8x1xf32>
    %42 = vector.broadcast %41 : vector<8x1xf32> to vector<8x8xf32>
    %43 = arith.divf %39, %42 : vector<8x8xf32>
    %c0_17 = arith.constant 0 : index
    %c1 = arith.constant 1 : index
    %c0_18 = arith.constant 0 : index
    %c0_19 = arith.constant 0 : index
    %44 = vector.load %arg8[%c0_17, %c1, %c0_18, %c0_19] : memref<1x2x8x8xf32, #tpu.memory_space<vmem>>, vector<1x1x8x8xf32>
    %45 = vector.shape_cast %44 : vector<1x1x8x8xf32> to vector<8x8xf32>
    %46 = vector.shape_cast %43 : vector<8x8xf32> to vector<1x1x8x8xf32>
    tpu.vector_store %arg8[%c0_17, %c1, %c0_18, %c0_19], %46 {strides = array<i32>} : memref<1x2x8x8xf32, #tpu.memory_space<vmem>>, vector<1x1x8x8xf32>,
    %cst_20 = arith.constant dense<0.000000e+00> : vector<8x8xf32>
    %47 = tpu.matmul %43, %33, %cst_20 {dimension_numbers = #tpu.dot_dimension_numbers<[1], [0], [0], [1], [0, 0, 1, 1], [], []>} : vector<8x8xf32>, vector<8x8xf32>, vector<8x8xf32> -> vector<8x8xf32>
    %48 = tpu.concatenate %30, %47 in 1 : vector<8x8xf32>, vector<8x8xf32> -> vector<8x16xf32>
    %49 = arith.index_cast %arg1 : i32 to index
    %c0_21 = arith.constant 0 : index
    %c0_22 = arith.constant 0 : index
    %50 = vector.load %arg4[%49, %c0_21, %c0_22] : memref<2x16x32xf32, #tpu.memory_space<vmem>>, vector<1x16x32xf32>
    %51 = vector.shape_cast %50 : vector<1x16x32xf32> to vector<16x32xf32>
    %cst_23 = arith.constant dense<0.000000e+00> : vector<8x32xf32>
    %52 = tpu.matmul %48, %51, %cst_23 {dimension_numbers = #tpu.dot_dimension_numbers<[1], [0], [0], [1], [0, 0, 1, 1], [], []>} : vector<8x16xf32>, vector<16x32xf32>, vector<8x32xf32> -> vector<8x32xf32>
    %c0_i32 = arith.constant 0 : i32
    %53 = arith.cmpi eq, %arg1, %c0_i32 : i32
    %54 = arith.extui %53 : i1 to i32
    %c0_i32_24 = arith.constant 0 : i32
    %55 = arith.cmpi ne, %54, %c0_i32_24 : i32
    scf.if %55 {
      %c0_28 = arith.constant 0 : index
      %c0_29 = arith.constant 0 : index
      %62 = vector.load %arg9[%c0_28, %c0_29] : memref<8x32xf32, #tpu.memory_space<vmem>>, vector<8x32xf32>
      tpu.vector_store %arg9[%c0_28, %c0_29], %52 {strides = array<i32>} : memref<8x32xf32, #tpu.memory_space<vmem>>, vector<8x32xf32>,
    } else {
    }
    %c0_i32_25 = arith.constant 0 : i32
    %56 = arith.cmpi ne, %arg1, %c0_i32_25 : i32
    %57 = arith.extui %56 : i1 to i32
    %c0_i32_26 = arith.constant 0 : i32
    %58 = arith.cmpi ne, %57, %c0_i32_26 : i32
    scf.if %58 {
      %c0_28 = arith.constant 0 : index
      %c0_29 = arith.constant 0 : index
      %62 = vector.load %arg9[%c0_28, %c0_29] : memref<8x32xf32, #tpu.memory_space<vmem>>, vector<8x32xf32>
      %63 = arith.addf %62, %52 : vector<8x32xf32>
      %c0_30 = arith.constant 0 : index
      %c0_31 = arith.constant 0 : index
      %64 = vector.load %arg9[%c0_30, %c0_31] : memref<8x32xf32, #tpu.memory_space<vmem>>, vector<8x32xf32>
      tpu.vector_store %arg9[%c0_30, %c0_31], %63 {strides = array<i32>} : memref<8x32xf32, #tpu.memory_space<vmem>>, vector<8x32xf32>,
    } else {
    }
    %c1_i32 = arith.constant 1 : i32
    %59 = arith.cmpi eq, %arg1, %c1_i32 : i32
    %60 = arith.extui %59 : i1 to i32
    %c0_i32_27 = arith.constant 0 : i32
    %61 = arith.cmpi ne, %60, %c0_i32_27 : i32
    scf.if %61 {
      %c0_28 = arith.constant 0 : index
      %c0_29 = arith.constant 0 : index
      %62 = vector.load %arg9[%c0_28, %c0_29] : memref<8x32xf32, #tpu.memory_space<vmem>>, vector<8x32xf32>
      %c0_30 = arith.constant 0 : index
      %c0_31 = arith.constant 0 : index
      %63 = vector.load %arg6[%c0_30, %c0_31] : memref<1x32xf32, #tpu.memory_space<vmem>>, vector<1x32xf32>
      %64 = vector.broadcast %63 : vector<1x32xf32> to vector<8x32xf32>
      %65 = arith.addf %62, %64 : vector<8x32xf32>
      %c0_32 = arith.constant 0 : index
      %c0_33 = arith.constant 0 : index
      %c0_34 = arith.constant 0 : index
      %66 = vector.load %arg7[%c0_32, %c0_33, %c0_34] : memref<1x8x32xf32, #tpu.memory_space<vmem>>, vector<1x8x32xf32>
      %67 = vector.shape_cast %66 : vector<1x8x32xf32> to vector<8x32xf32>
      %68 = vector.shape_cast %65 : vector<8x32xf32> to vector<1x8x32xf32>
      tpu.vector_store %arg7[%c0_32, %c0_33, %c0_34], %68 {strides = array<i32>} : memref<1x8x32xf32, #tpu.memory_space<vmem>>, vector<1x8x32xf32>,
    } else {
    }
    return
  }
  func.func @transform_0(%arg0: i32, %arg1: i32) -> (i32, i32, i32) {
    %c0_i32 = arith.constant 0 : i32
    %c0_i32_0 = arith.constant 0 : i32
    %c0_i32_1 = arith.constant 0 : i32
    return %arg0, %c0_i32, %c0_i32_0 : i32, i32, i32
  }
  func.func @transform_1(%arg0: i32, %arg1: i32) -> (i32, i32, i32) {
    %c0_i32 = arith.constant 0 : i32
    %c0_i32_0 = arith.constant 0 : i32
    %c0_i32_1 = arith.constant 0 : i32
    %c0_i32_2 = arith.constant 0 : i32
    return %c0_i32, %c0_i32_0, %c0_i32_1 : i32, i32, i32
  }
  func.func @transform_2(%arg0: i32, %arg1: i32) -> (i32, i32, i32) {
    %c0_i32 = arith.constant 0 : i32
    %c0_i32_0 = arith.constant 0 : i32
    %c0_i32_1 = arith.constant 0 : i32
    %c0_i32_2 = arith.constant 0 : i32
    return %c0_i32, %c0_i32_0, %c0_i32_1 : i32, i32, i32
  }
  func.func @transform_3(%arg0: i32, %arg1: i32) -> (i32, i32, i32) {
    %c0_i32 = arith.constant 0 : i32
    %c0_i32_0 = arith.constant 0 : i32
    %c0_i32_1 = arith.constant 0 : i32
    %c0_i32_2 = arith.constant 0 : i32
    return %c0_i32, %c0_i32_0, %c0_i32_1 : i32, i32, i32
  }
  func.func @transform_4(%arg0: i32, %arg1: i32) -> (i32, i32) {
    %c0_i32 = arith.constant 0 : i32
    %c0_i32_0 = arith.constant 0 : i32
    %c0_i32_1 = arith.constant 0 : i32
    return %c0_i32, %c0_i32_0 : i32, i32
  }
  func.func @transform_5(%arg0: i32, %arg1: i32) -> (i32, i32, i32) {
    %c0_i32 = arith.constant 0 : i32
    %c0_i32_0 = arith.constant 0 : i32
    %c0_i32_1 = arith.constant 0 : i32
    return %arg0, %c0_i32, %c0_i32_0 : i32, i32, i32
  }
  func.func @transform_6(%arg0: i32, %arg1: i32) -> (i32, i32, i32, i32) {
    %c0_i32 = arith.constant 0 : i32
    %c0_i32_0 = arith.constant 0 : i32
    %c0_i32_1 = arith.constant 0 : i32
    return %arg0, %arg1, %c0_i32, %c0_i32_0 : i32, i32, i32, i32
  }
}

</mosaic_0001>

<llo_original>
// kernel: tpu_custom_call.1
$region0: #{tpu_custom_call.1}
  #allocation0 [shape = 'u32[]', space=smem, size = 0x4, offset = 0x4, fixed_abs, tag = 'smem constant byte address 0x4 - core index']
  #allocation1 [shape = 'u32[144,128]{1,0:T(1,128)}', space=vmem, size = 0x12000, scoped, tag = 'internal scratch']
  #allocation2 [shape = 'f32[8,32]{1,0:T(8,128)}', space=vmem, size = 0x1000, scoped, tag = 'scratch operand']
  %s0 = inlined_call_operand.hbm [shape: f32[2,8,32], index: 0, kind: input, shape index: {}]
  %s1 = inlined_call_operand.hbm [shape: f32[2,32,48], index: 1, kind: input, shape index: {}]
  %s2 = inlined_call_operand.hbm [shape: f32[2,16,32], index: 2, kind: input, shape index: {}]
  %s3 = inlined_call_operand.vmem [shape: f32[2,1,48], index: 3, kind: input, shape index: {}]
  %s4 = inlined_call_operand.vmem [shape: f32[1,32], index: 4, kind: input, shape index: {}]
  %s5 = inlined_call_operand.hbm [shape: f32[2,8,32], index: 5, kind: output, shape index: {0}]
  %s6 = inlined_call_operand.hbm [shape: f32[2,4,8,8], index: 6, kind: output, shape index: {1}]
  %7 = xla_tuple %s5, %s6
  %s8 = sld [smem:[#allocation0]]
  $region85: #{tpu_custom_call.1} parent=0
    _
  %s10 = ssub.s32 1, %s8
  %s11 = scalar_select 0, %s10, %s8
  $region1: #{tpu_custom_call.1} parent=0
    #allocation3 [shape = 'u8[8192]{0}', space=vmem, size = 0x2000, scoped, tag = 'input window, operand 0']
    #allocation4 [shape = 's32[2]{0}', space=sflag, size = 0x8, scoped, tag = 'scoped memory for tpu_custom_call.1']
    #allocation5 [shape = 's32[2]{0}', space=sflag, size = 0x8, scoped, tag = 'scoped memory for tpu_custom_call.1']
    #allocation6 [shape = 'u8[32768]{0}', space=vmem, size = 0x8000, scoped, tag = 'input window, operand 1, single buffered']
    #allocation7 [shape = 's32[1]{0}', space=sflag, size = 0x4, scoped, tag = 'scoped memory for tpu_custom_call.1']
    #allocation8 [shape = 'u8[16384]{0}', space=vmem, size = 0x4000, scoped, tag = 'input window, operand 2, single buffered']
    #allocation9 [shape = 'u8[8192]{0}', space=vmem, size = 0x2000, scoped, tag = 'output window, operand 0']
    #allocation10 [shape = 'u8[16384]{0}', space=vmem, size = 0x4000, scoped, tag = 'output window, operand 1']
    #allocation11 [shape = 's32[2]{0}', space=sflag, size = 0x8, scoped, tag = 'scoped memory for tpu_custom_call.1']
    %12 = vsyncpa [#allocation4], 0
    %s13 = scalar_lea.sflag [#allocation4], 1
    %14 = vsyncpa %s13, 0
    %15 = vsyncpa [#allocation7], 0
    %16 = vsyncpa [#allocation5], 0
    %s17 = scalar_lea.sflag [#allocation5], 1
    %18 = vsyncpa %s17, 0
    %19 = vsyncpa [#allocation11], 0
    %s20 = scalar_lea.sflag [#allocation11], 1
    %21 = vsyncpa %s20, 0
    loop: start=0, step=1, limit=6
    $region2: #{tpu_custom_call.1} parent=1 // loop_pre_header
      _
    $region3: #{tpu_custom_call.1} parent=1 // loop_header
      %s23 = sphi 0, %s27
      %p24 = scmp.ge.s32.totalorder %s23, 6
      %s30 = sphi 0, %s42
      %s31 = sphi 0, %s38
      %s32 = sphi 0, %s30
      %s33 = sphi 0, %s31
      %s34 = sphi 0, %s32
      %s35 = sphi 0, %s33
      %s45 = sphi 0, %s47
      %s48 = sphi 0, %s45
      %s49 = sphi 0, %s48
      %s65 = sphi 0, %s49
      %s69 = sphi 0, %s69
      %s71 = sphi 0, %s69
      %s72 = sphi 0, %s71
      %s86 = sphi 0, %s72
      %s90 = sphi 0, %s90
      %s92 = sphi 0, %s90
      %s93 = sphi 0, %s92
      %s107 = sphi 0, %s93
      %s111 = sphi 0, %s111
      %s113 = sphi 0, %s111
      %s114 = sphi 0, %s113
      %s128 = sphi 0, %s114
      %s132 = sphi 0, %s132
      %s134 = sphi 0, %s132
      %s135 = sphi 0, %s134
      %s149 = sphi 0, %s135
      %s155 = sphi 0, %s157
      %s158 = sphi 0, %s155
      %s159 = sphi 0, %s158
      %s175 = sphi 0, %s159
      %s183 = sphi 0, %s185
      %s186 = sphi 0, %s183
      %s187 = sphi 0, %s186
      %s203 = sphi 0, %s187
    $region4: #{tpu_custom_call.1} parent=1 // loop_header_branch
      %26 = sbr.rel (%p24) target = $region8
    $region5: #{tpu_custom_call.1} parent=1 // loop_body
      %s28 = ssub.s32 %s23, 1
      %s29 = ssub.s32 %s23, 2
      %s36 = sadd.s32 1, %s31
      %p37 = scmp.ge.s32.totalorder %s36, 2
      %s38 = scalar_select %p37, 0, %s36
      %s39 = sadd.s32 1, %s30
      %s40 = scalar_select %p37, %s39, %s30
      %p41 = scmp.ge.s32.totalorder %s40, 2
      %s42 = scalar_select %p41, 0, %s40
      %s43 = ssub.s32 %s30, %s42
      %p44 = scmp.eq.s32.totalorder %s43, 0
      %s46 = sadd.s32 %s45, 1
      %s47 = scalar_select %p44, %s45, %s46
      %p50 = pneg %p44
      %p51 = scmp.eq.s32.totalorder %s23, 3
      %p52 = por %p50, %p51
      %p53 = scmp.ne.s32.totalorder %s45, %s48
      %p54 = scmp.eq.s32.totalorder %s23, 0
      %p55 = por %p53, %p54
      %p56 = scmp.ne.s32.totalorder %s45, %s48
      %p57 = scmp.eq.s32.totalorder %s28, 3
      %p58 = por %p56, %p57
      %p59 = scmp.ne.s32.totalorder %s48, %s49
      %p60 = scmp.eq.s32.totalorder %s28, 0
      %p61 = por %p59, %p60
      %p62 = scmp.ne.s32.totalorder %s48, %s49
      %p63 = scmp.eq.s32.totalorder %s29, 3
      %p64 = por %p62, %p63
      %p66 = scmp.ne.s32.totalorder %s49, %s65
      %p67 = scmp.eq.s32.totalorder %s29, 0
      %p68 = por %p66, %p67
      %s70 = sadd.s32 %s69, 1
      %p73 = scmp.eq.s32.totalorder %s23, 3
      %p74 = scmp.ne.s32.totalorder %s69, %s71
      %p75 = scmp.eq.s32.totalorder %s23, 0
      %p76 = por %p74, %p75
      %p77 = scmp.ne.s32.totalorder %s69, %s71
      %p78 = scmp.eq.s32.totalorder %s28, 3
      %p79 = por %p77, %p78
      %p80 = scmp.ne.s32.totalorder %s71, %s72
      %p81 = scmp.eq.s32.totalorder %s28, 0
      %p82 = por %p80, %p81
      %p83 = scmp.ne.s32.totalorder %s71, %s72
      %p84 = scmp.eq.s32.totalorder %s29, 3
      %p85 = por %p83, %p84
      %p87 = scmp.ne.s32.totalorder %s72, %s86
      %p88 = scmp.eq.s32.totalorder %s29, 0
      %p89 = por %p87, %p88
      %s91 = sadd.s32 %s90, 1
      %p94 = scmp.eq.s32.totalorder %s23, 3
      %p95 = scmp.ne.s32.totalorder %s90, %s92
      %p96 = scmp.eq.s32.totalorder %s23, 0
      %p97 = por %p95, %p96
      %p98 = scmp.ne.s32.totalorder %s90, %s92
      %p99 = scmp.eq.s32.totalorder %s28, 3
      %p100 = por %p98, %p99
      %p101 = scmp.ne.s32.totalorder %s92, %s93
      %p102 = scmp.eq.s32.totalorder %s28, 0
      %p103 = por %p101, %p102
      %p104 = scmp.ne.s32.totalorder %s92, %s93
      %p105 = scmp.eq.s32.totalorder %s29, 3
      %p106 = por %p104, %p105
      %p108 = scmp.ne.s32.totalorder %s93, %s107
      %p109 = scmp.eq.s32.totalorder %s29, 0
      %p110 = por %p108, %p109
      %s112 = sadd.s32 %s111, 1
      %p115 = scmp.eq.s32.totalorder %s23, 3
      %p116 = scmp.ne.s32.totalorder %s111, %s113
      %p117 = scmp.eq.s32.totalorder %s23, 0
      %p118 = por %p116, %p117
      %p119 = scmp.ne.s32.totalorder %s111, %s113
      %p120 = scmp.eq.s32.totalorder %s28, 3
      %p121 = por %p119, %p120
      %p122 = scmp.ne.s32.totalorder %s113, %s114
      %p123 = scmp.eq.s32.totalorder %s28, 0
      %p124 = por %p122, %p123
      %p125 = scmp.ne.s32.totalorder %s113, %s114
      %p126 = scmp.eq.s32.totalorder %s29, 3
      %p127 = por %p125, %p126
      %p129 = scmp.ne.s32.totalorder %s114, %s128
      %p130 = scmp.eq.s32.totalorder %s29, 0
      %p131 = por %p129, %p130
      %s133 = sadd.s32 %s132, 1
      %p136 = scmp.eq.s32.totalorder %s23, 3
      %p137 = scmp.ne.s32.totalorder %s132, %s134
      %p138 = scmp.eq.s32.totalorder %s23, 0
      %p139 = por %p137, %p138
      %p140 = scmp.ne.s32.totalorder %s132, %s134
      %p141 = scmp.eq.s32.totalorder %s28, 3
      %p142 = por %p140, %p141
      %p143 = scmp.ne.s32.totalorder %s134, %s135
      %p144 = scmp.eq.s32.totalorder %s28, 0
      %p145 = por %p143, %p144
      %p146 = scmp.ne.s32.totalorder %s134, %s135
      %p147 = scmp.eq.s32.totalorder %s29, 3
      %p148 = por %p146, %p147
      %p150 = scmp.ne.s32.totalorder %s135, %s149
      %p151 = scmp.eq.s32.totalorder %s29, 0
      %p152 = por %p150, %p151
      %s153 = ssub.s32 %s30, %s42
      %p154 = scmp.eq.s32.totalorder %s153, 0
      %s156 = sadd.s32 %s155, 1
      %s157 = scalar_select %p154, %s155, %s156
      %p160 = pneg %p154
      %p161 = scmp.eq.s32.totalorder %s23, 3
      %p162 = por %p160, %p161
      %p163 = scmp.ne.s32.totalorder %s155, %s158
      %p164 = scmp.eq.s32.totalorder %s23, 0
      %p165 = por %p163, %p164
      %p166 = scmp.ne.s32.totalorder %s155, %s158
      %p167 = scmp.eq.s32.totalorder %s28, 3
      %p168 = por %p166, %p167
      %p169 = scmp.ne.s32.totalorder %s158, %s159
      %p170 = scmp.eq.s32.totalorder %s28, 0
      %p171 = por %p169, %p170
      %p172 = scmp.ne.s32.totalorder %s158, %s159
      %p173 = scmp.eq.s32.totalorder %s29, 3
      %p174 = por %p172, %p173
      %p176 = scmp.ne.s32.totalorder %s159, %s175
      %p177 = scmp.eq.s32.totalorder %s29, 0
      %p178 = por %p176, %p177
      %s179 = ssub.s32 %s30, %s42
      %s180 = ssub.s32 %s31, %s38
      %s181 = sor.u32 %s179, %s180
      %p182 = scmp.eq.s32.totalorder %s181, 0
      %s184 = sadd.s32 %s183, 1
      %s185 = scalar_select %p182, %s183, %s184
      %p188 = pneg %p182
      %p189 = scmp.eq.s32.totalorder %s23, 3
      %p190 = por %p188, %p189
      %p191 = scmp.ne.s32.totalorder %s183, %s186
      %p192 = scmp.eq.s32.totalorder %s23, 0
      %p193 = por %p191, %p192
      %p194 = scmp.ne.s32.totalorder %s183, %s186
      %p195 = scmp.eq.s32.totalorder %s28, 3
      %p196 = por %p194, %p195
      %p197 = scmp.ne.s32.totalorder %s186, %s187
      %p198 = scmp.eq.s32.totalorder %s28, 0
      %p199 = por %p197, %p198
      %p200 = scmp.ne.s32.totalorder %s186, %s187
      %p201 = scmp.eq.s32.totalorder %s29, 3
      %p202 = por %p200, %p201
      %p204 = scmp.ne.s32.totalorder %s187, %s203
      %p205 = scmp.eq.s32.totalorder %s29, 0
      %p206 = por %p204, %p205
      %p207 = scmp.le.s32.totalorder 1, %s23
      %p208 = scmp.lt.s32.totalorder %s23, 5
      %p209 = pnand %p207, %p208
      %p210 = pneg %p209
      // Predicated region
      $region9: #{tpu_custom_call.1} parent=5 // pred_check
        _
      $region10: #{tpu_custom_call.1} parent=5 // pred_check_branch
        %212 = sbr.rel (%p209) target = $region12
      $region11: #{tpu_custom_call.1} parent=5 // pred_region
        %s213 = ssub.s32 %s23, 1
        // Predicated region
        $region13: #{tpu_custom_call.1} parent=11 // pred_check
          %p214 = pneg %p82
        $region14: #{tpu_custom_call.1} parent=11 // pred_check_branch
          %216 = sbr.rel (%p214) target = $region16
        $region15: #{tpu_custom_call.1} parent=11 // pred_region
          %s218 = ssub.s32 1024, 1024
          %219 = vsyncadd [#allocation7], %s218
          %s220 = sshll.u32 [#allocation6], 4
          %s221 = int_to_ptr.vmem [resolvable:$true] %s220
          %226 = dma.hbm_to_vmem [thread:$0]  %s1, 1024, %s221, [#allocation7], 128, 128, 8
        $region16: #{tpu_custom_call.1} parent=11 // pred_fallthru
          _
        // Predicated region
        $region17: #{tpu_custom_call.1} parent=11 // pred_check
          %p227 = pneg %p103
        $region18: #{tpu_custom_call.1} parent=11 // pred_check_branch
          %229 = sbr.rel (%p227) target = $region20
        $region19: #{tpu_custom_call.1} parent=11 // pred_region
          %s231 = ssub.s32 512, 512
          %232 = vsyncadd [#allocation7], %s231
          %s233 = sshll.u32 [#allocation8], 4
          %s234 = int_to_ptr.vmem [resolvable:$true] %s233
          %239 = dma.hbm_to_vmem [thread:$0]  %s2, 512, %s234, [#allocation7], 128, 128, 8
        $region20: #{tpu_custom_call.1} parent=11 // pred_fallthru
          _
        // Predicated region
        $region21: #{tpu_custom_call.1} parent=11 // pred_check
          %p240 = pneg %p124
        $region22: #{tpu_custom_call.1} parent=11 // pred_check_branch
          %242 = sbr.rel (%p240) target = $region24
        $region23: #{tpu_custom_call.1} parent=11 // pred_region
          _
        $region24: #{tpu_custom_call.1} parent=11 // pred_fallthru
          _
        // Predicated region
        $region25: #{tpu_custom_call.1} parent=11 // pred_check
          %p243 = pneg %p145
        $region26: #{tpu_custom_call.1} parent=11 // pred_check_branch
          %245 = sbr.rel (%p243) target = $region28
        $region27: #{tpu_custom_call.1} parent=11 // pred_region
          _
        $region28: #{tpu_custom_call.1} parent=11 // pred_fallthru
          _
      $region12: #{tpu_custom_call.1} parent=5 // pred_fallthru
        _
      %p246 = scmp.lt.s32.totalorder %s23, 4
      // Predicated region
      $region29: #{tpu_custom_call.1} parent=5 // pred_check
        %p247 = pneg %p246
      $region30: #{tpu_custom_call.1} parent=5 // pred_check_branch
        %249 = sbr.rel (%p247) target = $region32
      $region31: #{tpu_custom_call.1} parent=5 // pred_region
        // Predicated region
        $region33: #{tpu_custom_call.1} parent=31 // pred_check
          %p250 = pneg %p55
        $region34: #{tpu_custom_call.1} parent=31 // pred_check_branch
          %252 = sbr.rel (%p250) target = $region36
        $region35: #{tpu_custom_call.1} parent=31 // pred_region
          %s253 = sand.u32 %s45, 1
          %s254 = scalar_lea.sflag [#allocation4], %s253
          %s255 = sand.u32 %s45, 1
          %s256 = smul.addr %s255, 8
          %s257 = scalar_lea.vmem [#allocation3], %s256
          %s259 = ssub.s32 128, 128
          %260 = vsyncadd %s254, %s259
          %s261 = smul.addr %s30, 128
          %s262 = scalar_lea.hbm %s0, %s261
          %s264 = sshll.u32 %s257, 4
          %s265 = int_to_ptr.vmem [resolvable:$true] %s264
          %267 = dma.hbm_to_vmem [thread:$0]  %s262, 128, %s265, %s254
        $region36: #{tpu_custom_call.1} parent=31 // pred_fallthru
          _
      $region32: #{tpu_custom_call.1} parent=5 // pred_fallthru
        _
      %p268 = scmp.le.s32.totalorder 1, %s23
      %p269 = scmp.lt.s32.totalorder %s23, 5
      %p270 = pnand %p268, %p269
      %p271 = pneg %p270
      // Predicated region
      $region37: #{tpu_custom_call.1} parent=5 // pred_check
        _
      $region38: #{tpu_custom_call.1} parent=5 // pred_check_branch
        %273 = sbr.rel (%p270) target = $region40
      $region39: #{tpu_custom_call.1} parent=5 // pred_region
        %s274 = ssub.s32 %s23, 1
        %s275 = sand.u32 %s48, 1
        %s276 = scalar_lea.sflag [#allocation4], %s275
        %s277 = sand.u32 %s48, 1
        %s278 = smul.addr %s277, 8
        %s279 = scalar_lea.vmem [#allocation3], %s278
        // Predicated region
        $region41: #{tpu_custom_call.1} parent=39 // pred_check
          %p280 = pneg %p61
        $region42: #{tpu_custom_call.1} parent=39 // pred_check_branch
          %282 = sbr.rel (%p280) target = $region44
        $region43: #{tpu_custom_call.1} parent=39 // pred_region
          %283 = dma.done %s276, 128
        $region44: #{tpu_custom_call.1} parent=39 // pred_fallthru
          _
        // Predicated region
        $region45: #{tpu_custom_call.1} parent=39 // pred_check
          %p284 = pneg %p82
        $region46: #{tpu_custom_call.1} parent=39 // pred_check_branch
          %286 = sbr.rel (%p284) target = $region48
        $region47: #{tpu_custom_call.1} parent=39 // pred_region
          %287 = dma.done [#allocation7], 1024
        $region48: #{tpu_custom_call.1} parent=39 // pred_fallthru
          _
        // Predicated region
        $region49: #{tpu_custom_call.1} parent=39 // pred_check
          %p288 = pneg %p103
        $region50: #{tpu_custom_call.1} parent=39 // pred_check_branch
          %290 = sbr.rel (%p288) target = $region52
        $region51: #{tpu_custom_call.1} parent=39 // pred_region
          %291 = dma.done [#allocation7], 512
        $region52: #{tpu_custom_call.1} parent=39 // pred_fallthru
          _
        %s292 = sand.u32 %s48, 1
        %s293 = scalar_lea.sflag [#allocation4], %s292
        %s294 = sand.u32 %s48, 1
        %s295 = smul.addr %s294, 8
        %s296 = scalar_lea.vmem [#allocation3], %s295
        %p297 = pneg %p61
        %p298 = pneg %p58
        %p299 = pneg %p82
        %p300 = pneg %p79
        %p301 = pneg %p103
        %p302 = pneg %p100
        %p303 = pneg %p124
        %p304 = pneg %p121
        %p305 = pneg %p145
        %p306 = pneg %p142
        %p307 = pneg %p171
        %p308 = pneg %p168
        %s309 = sand.u32 %s158, 1
        %s310 = scalar_lea.sflag [#allocation5], %s309
        %s311 = sand.u32 %s158, 1
        %s312 = smul.addr %s311, 8
        %s313 = scalar_lea.vmem [#allocation9], %s312
        %p314 = pneg %p199
        %p315 = pneg %p196
        %s316 = sand.u32 %s186, 1
        %s317 = scalar_lea.sflag [#allocation11], %s316
        %s318 = sand.u32 %s186, 1
        %s319 = smul.addr %s318, 16
        %s320 = scalar_lea.vmem [#allocation10], %s319
        %s321 = smul.u32 2, %s33
        %v322 = vld [vmem:[%s279] sm:$0xff]
        %s323 = smul.u32 %s33, 32
        %s324 = scalar_lea.vmem [#allocation6], %s323
        %v325 = vld [vmem:[%s324] sm:$0xff]
        %v326 = vld [vmem:[%s324 + $0x8] sm:$0xff]
        %v327 = vld [vmem:[%s324 + $0x10] sm:$0xff]
        %v328 = vld [vmem:[%s324 + $0x18] sm:$0xff]
        %s329 = scalar_lea.vmem %s3, %s33
        %v330 = vld [vmem:[%s329] sm:$0x1]
        %v332 = vlaneseq
        %v333 = vshrl.u32 %v332, 7
        %v334 = vsub.s32 0, %v333
        %v335 = vrot.slane %v330, %v334
        %vm337 = vcmask 261120
        %v339 = vsel %vm337, %v322, 0
        %341 = vmatprep.subr.mxu0 0.0
        %342 = vmatpush1.msra.mxu0 0.0
        %343 = vmatprep.subr.mxu0 0.0
        %344 = vmatpush1.msra.mxu0 0.0
        %345 = vmatprep.subr.mxu0 0.0
        %346 = vmatpush1.msra.mxu0 0.0
        %347 = vmatprep.subr.mxu0 0.0
        %348 = vmatpush1.msra.mxu0 0.0
        %349 = vmatprep.subr.mxu0 0.0
        %350 = vmatpush1.msra.mxu0 0.0
        %351 = vmatprep.subr.mxu0 0.0
        %352 = vmatpush1.msra.mxu0 0.0
        %353 = vmatprep.subr.mxu0 0.0
        %354 = vmatpush1.msra.mxu0 0.0
        %355 = vmatprep.subr.mxu0 0.0
        %356 = vmatpush1.msra.mxu0 0.0
        %357 = vmatprep.subr.mxu0 0.0
        %358 = vmatpush1.msra.mxu0 0.0
        %359 = vmatprep.subr.mxu0 0.0
        %360 = vmatpush1.msra.mxu0 0.0
        %361 = vmatprep.subr.mxu0 0.0
        %362 = vmatpush1.msra.mxu0 0.0
        %363 = vmatprep.subr.mxu0 0.0
        %364 = vmatpush1.msra.mxu0 0.0
        %365 = vmatprep.subr.mxu0 0.0
        %366 = vmatpush1.msra.mxu0 %v328
        %367 = vmatprep.subr.mxu0 0.0
        %368 = vmatpush1.msra.mxu0 %v327
        %369 = vmatprep.subr.mxu0 0.0
        %370 = vmatpush1.msra.mxu0 %v326
        %371 = vmatprep.subr.mxu0 0.0
        %372 = vmatpush1.msra.mxu0 %v325
        %373 = vmatprep.subr.mxu0 0.0
        %374 = vmatpush2.msra.mxu0 0.0
        %375 = vmatprep.subr.mxu0 0.0
        %376 = vmatpush2.msra.mxu0 0.0
        %377 = vmatprep.subr.mxu0 0.0
        %378 = vmatpush2.msra.mxu0 0.0
        %379 = vmatprep.subr.mxu0 0.0
        %380 = vmatpush2.msra.mxu0 0.0
        %381 = vmatprep.subr.mxu0 0.0
        %382 = vmatpush2.msra.mxu0 0.0
        %383 = vmatprep.subr.mxu0 0.0
        %384 = vmatpush2.msra.mxu0 0.0
        %385 = vmatprep.subr.mxu0 0.0
        %386 = vmatpush2.msra.mxu0 0.0
        %387 = vmatprep.subr.mxu0 0.0
        %388 = vmatpush2.msra.mxu0 0.0
        %389 = vmatprep.subr.mxu0 0.0
        %390 = vmatpush2.msra.mxu0 0.0
        %391 = vmatprep.subr.mxu0 0.0
        %392 = vmatpush2.msra.mxu0 0.0
        %393 = vmatprep.subr.mxu0 0.0
        %394 = vmatpush2.msra.mxu0 0.0
        %395 = vmatprep.subr.mxu0 0.0
        %396 = vmatpush2.msra.mxu0 0.0
        %397 = vmatprep.subr.mxu0 0.0
        %398 = vmatpush2.msra.mxu0 0.0
        %399 = vmatprep.subr.mxu0 0.0
        %400 = vmatpush2.msra.mxu0 0.0
        %401 = vmatprep.subr.mxu0 0.0
        %402 = vmatpush2.msra.mxu0 0.0
        %403 = vmatprep.subr.mxu0 0.0
        %404 = vmatpush2.msra.mxu0 0.0
        %405 = vmatprep.mubr.f32.mxu0 0.0
        %406 = vmatmul.mubr.f32.gmra.mxu0 %v339
        %v407 = vpop.f32.mrf.mxu0
        %v408 = vadd.f32 %v335, %v407
        %v409 = vpop.f32.mrf.mxu0
        %410 = vdwg.mxu0
        %412 = vrot.lane.b32.xlu0 %v408, 112
        %v413 = vpop.permute.xlu0 %412
        %vm414 = vcmask 64512
        %v415 = vsel %vm414, %v408, 0
        %v417 = vsel %vm414, %v413, 0
        %419 = vmatprep.subr.mxu0 0.0
        %420 = vmatpush1.xpose.msra.mxu0 0.0
        %421 = vmatprep.subr.mxu0 0.0
        %422 = vmatpush1.xpose.msra.mxu0 0.0
        %423 = vmatprep.subr.mxu0 0.0
        %424 = vmatpush1.xpose.msra.mxu0 0.0
        %425 = vmatprep.subr.mxu0 0.0
        %426 = vmatpush1.xpose.msra.mxu0 0.0
        %427 = vmatprep.subr.mxu0 0.0
        %428 = vmatpush1.xpose.msra.mxu0 0.0
        %429 = vmatprep.subr.mxu0 0.0
        %430 = vmatpush1.xpose.msra.mxu0 0.0
        %431 = vmatprep.subr.mxu0 0.0
        %432 = vmatpush1.xpose.msra.mxu0 0.0
        %433 = vmatprep.subr.mxu0 0.0
        %434 = vmatpush1.xpose.msra.mxu0 0.0
        %435 = vmatprep.subr.mxu0 0.0
        %436 = vmatpush1.xpose.msra.mxu0 0.0
        %437 = vmatprep.subr.mxu0 0.0
        %438 = vmatpush1.xpose.msra.mxu0 0.0
        %439 = vmatprep.subr.mxu0 0.0
        %440 = vmatpush1.xpose.msra.mxu0 0.0
        %441 = vmatprep.subr.mxu0 0.0
        %442 = vmatpush1.xpose.msra.mxu0 0.0
        %443 = vmatprep.subr.mxu0 0.0
        %444 = vmatpush1.xpose.msra.mxu0 0.0
        %445 = vmatprep.subr.mxu0 0.0
        %446 = vmatpush1.xpose.msra.mxu0 0.0
        %447 = vmatprep.subr.mxu0 0.0
        %448 = vmatpush1.xpose.msra.mxu0 0.0
        %449 = vmatprep.subr.mxu0 0.0
        %450 = vmatpush1.xpose.msra.mxu0 %v417
        %451 = vmatprep.subr.mxu0 0.0
        %452 = vmatpush2.xpose.msra.mxu0 0.0
        %453 = vmatprep.subr.mxu0 0.0
        %454 = vmatpush2.xpose.msra.mxu0 0.0
        %455 = vmatprep.subr.mxu0 0.0
        %456 = vmatpush2.xpose.msra.mxu0 0.0
        %457 = vmatprep.subr.mxu0 0.0
        %458 = vmatpush2.xpose.msra.mxu0 0.0
        %459 = vmatprep.subr.mxu0 0.0
        %460 = vmatpush2.xpose.msra.mxu0 0.0
        %461 = vmatprep.subr.mxu0 0.0
        %462 = vmatpush2.xpose.msra.mxu0 0.0
        %463 = vmatprep.subr.mxu0 0.0
        %464 = vmatpush2.xpose.msra.mxu0 0.0
        %465 = vmatprep.subr.mxu0 0.0
        %466 = vmatpush2.xpose.msra.mxu0 0.0
        %467 = vmatprep.subr.mxu0 0.0
        %468 = vmatpush2.xpose.msra.mxu0 0.0
        %469 = vmatprep.subr.mxu0 0.0
        %470 = vmatpush2.xpose.msra.mxu0 0.0
        %471 = vmatprep.subr.mxu0 0.0
        %472 = vmatpush2.xpose.msra.mxu0 0.0
        %473 = vmatprep.subr.mxu0 0.0
        %474 = vmatpush2.xpose.msra.mxu0 0.0
        %475 = vmatprep.subr.mxu0 0.0
        %476 = vmatpush2.xpose.msra.mxu0 0.0
        %477 = vmatprep.subr.mxu0 0.0
        %478 = vmatpush2.xpose.msra.mxu0 0.0
        %479 = vmatprep.subr.mxu0 0.0
        %480 = vmatpush2.xpose.msra.mxu0 0.0
        %481 = vmatprep.subr.mxu0 0.0
        %482 = vmatpush2.xpose.msra.mxu0 0.0
        %483 = vmatprep.mubr.f32.mxu0 0.0
        %484 = vmatmul.mubr.f32.gmra.mxu0 %v415
        %v485 = vpop.f32.mrf.mxu0
        %v486 = vadd.f32 0.0, %v485
        %v487 = vpop.f32.mrf.mxu0
        %488 = vdwg.mxu0
        %v489 = vsel %vm414, %v486, -inf
        %490 = vmax.xlane.f32.xlu0 %v489
        %v491 = vpop.xlane.xlu0 %490
        %v492 = vsub.f32 %v486, %v491
        %v493 = vmul.f32 %v492, 1.442695
        %v494 = vpow.pop %v493
        %v495 = vsel %vm414, %v494, 0.0
        %496 = vadd.xlane.f32.xlu0 %v495
        %v497 = vpop.xlane.xlu0 %496
        %v498 = vrcp.pop %v497
        %v499 = vmul.f32 %v494, %v498
        %500 = vst.msk [vmem:[%s320] sm:$0xff] %vm414, %v499
        %501 = vrot.lane.b32.xlu0 %v408, 96
        %v502 = vpop.permute.xlu0 %501
        %v505 = vsel %vm414, %v499, 0
        %507 = vmatprep.subr.mxu0 0.0
        %508 = vmatpush1.msra.mxu0 0.0
        %509 = vmatprep.subr.mxu0 0.0
        %510 = vmatpush1.msra.mxu0 0.0
        %511 = vmatprep.subr.mxu0 0.0
        %512 = vmatpush1.msra.mxu0 0.0
        %513 = vmatprep.subr.mxu0 0.0
        %514 = vmatpush1.msra.mxu0 0.0
        %515 = vmatprep.subr.mxu0 0.0
        %516 = vmatpush1.msra.mxu0 0.0
        %517 = vmatprep.subr.mxu0 0.0
        %518 = vmatpush1.msra.mxu0 0.0
        %519 = vmatprep.subr.mxu0 0.0
        %520 = vmatpush1.msra.mxu0 0.0
        %521 = vmatprep.subr.mxu0 0.0
        %522 = vmatpush1.msra.mxu0 0.0
        %523 = vmatprep.subr.mxu0 0.0
        %524 = vmatpush1.msra.mxu0 0.0
        %525 = vmatprep.subr.mxu0 0.0
        %526 = vmatpush1.msra.mxu0 0.0
        %527 = vmatprep.subr.mxu0 0.0
        %528 = vmatpush1.msra.mxu0 0.0
        %529 = vmatprep.subr.mxu0 0.0
        %530 = vmatpush1.msra.mxu0 0.0
        %531 = vmatprep.subr.mxu0 0.0
        %532 = vmatpush1.msra.mxu0 0.0
        %533 = vmatprep.subr.mxu0 0.0
        %534 = vmatpush1.msra.mxu0 0.0
        %535 = vmatprep.subr.mxu0 0.0
        %536 = vmatpush1.msra.mxu0 0.0
        %537 = vmatprep.subr.mxu0 0.0
        %538 = vmatpush1.msra.mxu0 %v502
        %539 = vmatprep.subr.mxu0 0.0
        %540 = vmatpush2.msra.mxu0 0.0
        %541 = vmatprep.subr.mxu0 0.0
        %542 = vmatpush2.msra.mxu0 0.0
        %543 = vmatprep.subr.mxu0 0.0
        %544 = vmatpush2.msra.mxu0 0.0
        %545 = vmatprep.subr.mxu0 0.0
        %546 = vmatpush2.msra.mxu0 0.0
        %547 = vmatprep.subr.mxu0 0.0
        %548 = vmatpush2.msra.mxu0 0.0
        %549 = vmatprep.subr.mxu0 0.0
        %550 = vmatpush2.msra.mxu0 0.0
        %551 = vmatprep.subr.mxu0 0.0
        %552 = vmatpush2.msra.mxu0 0.0
        %553 = vmatprep.subr.mxu0 0.0
        %554 = vmatpush2.msra.mxu0 0.0
        %555 = vmatprep.subr.mxu0 0.0
        %556 = vmatpush2.msra.mxu0 0.0
        %557 = vmatprep.subr.mxu0 0.0
        %558 = vmatpush2.msra.mxu0 0.0
        %559 = vmatprep.subr.mxu0 0.0
        %560 = vmatpush2.msra.mxu0 0.0
        %561 = vmatprep.subr.mxu0 0.0
        %562 = vmatpush2.msra.mxu0 0.0
        %563 = vmatprep.subr.mxu0 0.0
        %564 = vmatpush2.msra.mxu0 0.0
        %565 = vmatprep.subr.mxu0 0.0
        %566 = vmatpush2.msra.mxu0 0.0
        %567 = vmatprep.subr.mxu0 0.0
        %568 = vmatpush2.msra.mxu0 0.0
        %569 = vmatprep.subr.mxu0 0.0
        %570 = vmatpush2.msra.mxu0 0.0
        %571 = vmatprep.mubr.f32.mxu0 0.0
        %572 = vmatmul.mubr.f32.gmra.mxu0 %v505
        %v573 = vpop.f32.mrf.mxu0
        %v574 = vadd.f32 0.0, %v573
        %v575 = vpop.f32.mrf.mxu0
        %576 = vdwg.mxu0
        %577 = vrot.lane.b32.xlu0 %v408, 120
        %v578 = vpop.permute.xlu0 %577
        %579 = vrot.lane.b32.xlu0 %v408, 104
        %v580 = vpop.permute.xlu0 %579
        %v581 = vsel %vm414, %v578, 0
        %v583 = vsel %vm414, %v580, 0
        %585 = vmatprep.subr.mxu0 0.0
        %586 = vmatpush1.xpose.msra.mxu0 0.0
        %587 = vmatprep.subr.mxu0 0.0
        %588 = vmatpush1.xpose.msra.mxu0 0.0
        %589 = vmatprep.subr.mxu0 0.0
        %590 = vmatpush1.xpose.msra.mxu0 0.0
        %591 = vmatprep.subr.mxu0 0.0
        %592 = vmatpush1.xpose.msra.mxu0 0.0
        %593 = vmatprep.subr.mxu0 0.0
        %594 = vmatpush1.xpose.msra.mxu0 0.0
        %595 = vmatprep.subr.mxu0 0.0
        %596 = vmatpush1.xpose.msra.mxu0 0.0
        %597 = vmatprep.subr.mxu0 0.0
        %598 = vmatpush1.xpose.msra.mxu0 0.0
        %599 = vmatprep.subr.mxu0 0.0
        %600 = vmatpush1.xpose.msra.mxu0 0.0
        %601 = vmatprep.subr.mxu0 0.0
        %602 = vmatpush1.xpose.msra.mxu0 0.0
        %603 = vmatprep.subr.mxu0 0.0
        %604 = vmatpush1.xpose.msra.mxu0 0.0
        %605 = vmatprep.subr.mxu0 0.0
        %606 = vmatpush1.xpose.msra.mxu0 0.0
        %607 = vmatprep.subr.mxu0 0.0
        %608 = vmatpush1.xpose.msra.mxu0 0.0
        %609 = vmatprep.subr.mxu0 0.0
        %610 = vmatpush1.xpose.msra.mxu0 0.0
        %611 = vmatprep.subr.mxu0 0.0
        %612 = vmatpush1.xpose.msra.mxu0 0.0
        %613 = vmatprep.subr.mxu0 0.0
        %614 = vmatpush1.xpose.msra.mxu0 0.0
        %615 = vmatprep.subr.mxu0 0.0
        %616 = vmatpush1.xpose.msra.mxu0 %v583
        %617 = vmatprep.subr.mxu0 0.0
        %618 = vmatpush2.xpose.msra.mxu0 0.0
        %619 = vmatprep.subr.mxu0 0.0
        %620 = vmatpush2.xpose.msra.mxu0 0.0
        %621 = vmatprep.subr.mxu0 0.0
        %622 = vmatpush2.xpose.msra.mxu0 0.0
        %623 = vmatprep.subr.mxu0 0.0
        %624 = vmatpush2.xpose.msra.mxu0 0.0
        %625 = vmatprep.subr.mxu0 0.0
        %626 = vmatpush2.xpose.msra.mxu0 0.0
        %627 = vmatprep.subr.mxu0 0.0
        %628 = vmatpush2.xpose.msra.mxu0 0.0
        %629 = vmatprep.subr.mxu0 0.0
        %630 = vmatpush2.xpose.msra.mxu0 0.0
        %631 = vmatprep.subr.mxu0 0.0
        %632 = vmatpush2.xpose.msra.mxu0 0.0
        %633 = vmatprep.subr.mxu0 0.0
        %634 = vmatpush2.xpose.msra.mxu0 0.0
        %635 = vmatprep.subr.mxu0 0.0
        %636 = vmatpush2.xpose.msra.mxu0 0.0
        %637 = vmatprep.subr.mxu0 0.0
        %638 = vmatpush2.xpose.msra.mxu0 0.0
        %639 = vmatprep.subr.mxu0 0.0
        %640 = vmatpush2.xpose.msra.mxu0 0.0
        %641 = vmatprep.subr.mxu0 0.0
        %642 = vmatpush2.xpose.msra.mxu0 0.0
        %643 = vmatprep.subr.mxu0 0.0
        %644 = vmatpush2.xpose.msra.mxu0 0.0
        %645 = vmatprep.subr.mxu0 0.0
        %646 = vmatpush2.xpose.msra.mxu0 0.0
        %647 = vmatprep.subr.mxu0 0.0
        %648 = vmatpush2.xpose.msra.mxu0 0.0
        %649 = vmatprep.mubr.f32.mxu0 0.0
        %650 = vmatmul.mubr.f32.gmra.mxu0 %v581
        %v651 = vpop.f32.mrf.mxu0
        %v652 = vadd.f32 0.0, %v651
        %v653 = vpop.f32.mrf.mxu0
        %654 = vdwg.mxu0
        %v655 = vsel %vm414, %v652, -inf
        %656 = vmax.xlane.f32.xlu0 %v655
        %v657 = vpop.xlane.xlu0 %656
        %v658 = vsub.f32 %v652, %v657
        %v659 = vmul.f32 %v658, 1.442695
        %v660 = vpow.pop %v659
        %v661 = vsel %vm414, %v660, 0.0
        %662 = vadd.xlane.f32.xlu0 %v661
        %v663 = vpop.xlane.xlu0 %662
        %v664 = vrcp.pop %v663
        %v665 = vmul.f32 %v660, %v664
        %s666 = scalar_lea.vmem %s320, 8 [#allocation10]
        %667 = vst.msk [vmem:[%s666] sm:$0xff] %vm414, %v665
        %668 = vrot.lane.b32.xlu0 %v408, 88
        %v669 = vpop.permute.xlu0 %668
        %v672 = vsel %vm414, %v665, 0
        %674 = vmatprep.subr.mxu0 0.0
        %675 = vmatpush1.msra.mxu0 0.0
        %676 = vmatprep.subr.mxu0 0.0
        %677 = vmatpush1.msra.mxu0 0.0
        %678 = vmatprep.subr.mxu0 0.0
        %679 = vmatpush1.msra.mxu0 0.0
        %680 = vmatprep.subr.mxu0 0.0
        %681 = vmatpush1.msra.mxu0 0.0
        %682 = vmatprep.subr.mxu0 0.0
        %683 = vmatpush1.msra.mxu0 0.0
        %684 = vmatprep.subr.mxu0 0.0
        %685 = vmatpush1.msra.mxu0 0.0
        %686 = vmatprep.subr.mxu0 0.0
        %687 = vmatpush1.msra.mxu0 0.0
        %688 = vmatprep.subr.mxu0 0.0
        %689 = vmatpush1.msra.mxu0 0.0
        %690 = vmatprep.subr.mxu0 0.0
        %691 = vmatpush1.msra.mxu0 0.0
        %692 = vmatprep.subr.mxu0 0.0
        %693 = vmatpush1.msra.mxu0 0.0
        %694 = vmatprep.subr.mxu0 0.0
        %695 = vmatpush1.msra.mxu0 0.0
        %696 = vmatprep.subr.mxu0 0.0
        %697 = vmatpush1.msra.mxu0 0.0
        %698 = vmatprep.subr.mxu0 0.0
        %699 = vmatpush1.msra.mxu0 0.0
        %700 = vmatprep.subr.mxu0 0.0
        %701 = vmatpush1.msra.mxu0 0.0
        %702 = vmatprep.subr.mxu0 0.0
        %703 = vmatpush1.msra.mxu0 0.0
        %704 = vmatprep.subr.mxu0 0.0
        %705 = vmatpush1.msra.mxu0 %v669
        %706 = vmatprep.subr.mxu0 0.0
        %707 = vmatpush2.msra.mxu0 0.0
        %708 = vmatprep.subr.mxu0 0.0
        %709 = vmatpush2.msra.mxu0 0.0
        %710 = vmatprep.subr.mxu0 0.0
        %711 = vmatpush2.msra.mxu0 0.0
        %712 = vmatprep.subr.mxu0 0.0
        %713 = vmatpush2.msra.mxu0 0.0
        %714 = vmatprep.subr.mxu0 0.0
        %715 = vmatpush2.msra.mxu0 0.0
        %716 = vmatprep.subr.mxu0 0.0
        %717 = vmatpush2.msra.mxu0 0.0
        %718 = vmatprep.subr.mxu0 0.0
        %719 = vmatpush2.msra.mxu0 0.0
        %720 = vmatprep.subr.mxu0 0.0
        %721 = vmatpush2.msra.mxu0 0.0
        %722 = vmatprep.subr.mxu0 0.0
        %723 = vmatpush2.msra.mxu0 0.0
        %724 = vmatprep.subr.mxu0 0.0
        %725 = vmatpush2.msra.mxu0 0.0
        %726 = vmatprep.subr.mxu0 0.0
        %727 = vmatpush2.msra.mxu0 0.0
        %728 = vmatprep.subr.mxu0 0.0
        %729 = vmatpush2.msra.mxu0 0.0
        %730 = vmatprep.subr.mxu0 0.0
        %731 = vmatpush2.msra.mxu0 0.0
        %732 = vmatprep.subr.mxu0 0.0
        %733 = vmatpush2.msra.mxu0 0.0
        %734 = vmatprep.subr.mxu0 0.0
        %735 = vmatpush2.msra.mxu0 0.0
        %736 = vmatprep.subr.mxu0 0.0
        %737 = vmatpush2.msra.mxu0 0.0
        %738 = vmatprep.mubr.f32.mxu0 0.0
        %739 = vmatmul.mubr.f32.gmra.mxu0 %v672
        %v740 = vpop.f32.mrf.mxu0
        %v741 = vadd.f32 0.0, %v740
        %v742 = vpop.f32.mrf.mxu0
        %743 = vdwg.mxu0
        %745 = vrot.lane.b32.xlu0 %v741, 8
        %v746 = vpop.permute.xlu0 %745
        %v748 = vsel %vm414, %v574, %v746
        %s749 = smul.u32 %s33, 16
        %s750 = scalar_lea.vmem [#allocation8], %s749
        %v751 = vld [vmem:[%s750] sm:$0xff]
        %v752 = vld [vmem:[%s750 + $0x8] sm:$0xff]
        %vm753 = vcmask 130048
        %v755 = vsel %vm753, %v748, 0
        %757 = vmatprep.subr.mxu0 0.0
        %758 = vmatpush1.msra.mxu0 0.0
        %759 = vmatprep.subr.mxu0 0.0
        %760 = vmatpush1.msra.mxu0 0.0
        %761 = vmatprep.subr.mxu0 0.0
        %762 = vmatpush1.msra.mxu0 0.0
        %763 = vmatprep.subr.mxu0 0.0
        %764 = vmatpush1.msra.mxu0 0.0
        %765 = vmatprep.subr.mxu0 0.0
        %766 = vmatpush1.msra.mxu0 0.0
        %767 = vmatprep.subr.mxu0 0.0
        %768 = vmatpush1.msra.mxu0 0.0
        %769 = vmatprep.subr.mxu0 0.0
        %770 = vmatpush1.msra.mxu0 0.0
        %771 = vmatprep.subr.mxu0 0.0
        %772 = vmatpush1.msra.mxu0 0.0
        %773 = vmatprep.subr.mxu0 0.0
        %774 = vmatpush1.msra.mxu0 0.0
        %775 = vmatprep.subr.mxu0 0.0
        %776 = vmatpush1.msra.mxu0 0.0
        %777 = vmatprep.subr.mxu0 0.0
        %778 = vmatpush1.msra.mxu0 0.0
        %779 = vmatprep.subr.mxu0 0.0
        %780 = vmatpush1.msra.mxu0 0.0
        %781 = vmatprep.subr.mxu0 0.0
        %782 = vmatpush1.msra.mxu0 0.0
        %783 = vmatprep.subr.mxu0 0.0
        %784 = vmatpush1.msra.mxu0 0.0
        %785 = vmatprep.subr.mxu0 0.0
        %786 = vmatpush1.msra.mxu0 %v752
        %787 = vmatprep.subr.mxu0 0.0
        %788 = vmatpush1.msra.mxu0 %v751
        %789 = vmatprep.subr.mxu0 0.0
        %790 = vmatpush2.msra.mxu0 0.0
        %791 = vmatprep.subr.mxu0 0.0
        %792 = vmatpush2.msra.mxu0 0.0
        %793 = vmatprep.subr.mxu0 0.0
        %794 = vmatpush2.msra.mxu0 0.0
        %795 = vmatprep.subr.mxu0 0.0
        %796 = vmatpush2.msra.mxu0 0.0
        %797 = vmatprep.subr.mxu0 0.0
        %798 = vmatpush2.msra.mxu0 0.0
        %799 = vmatprep.subr.mxu0 0.0
        %800 = vmatpush2.msra.mxu0 0.0
        %801 = vmatprep.subr.mxu0 0.0
        %802 = vmatpush2.msra.mxu0 0.0
        %803 = vmatprep.subr.mxu0 0.0
        %804 = vmatpush2.msra.mxu0 0.0
        %805 = vmatprep.subr.mxu0 0.0
        %806 = vmatpush2.msra.mxu0 0.0
        %807 = vmatprep.subr.mxu0 0.0
        %808 = vmatpush2.msra.mxu0 0.0
        %809 = vmatprep.subr.mxu0 0.0
        %810 = vmatpush2.msra.mxu0 0.0
        %811 = vmatprep.subr.mxu0 0.0
        %812 = vmatpush2.msra.mxu0 0.0
        %813 = vmatprep.subr.mxu0 0.0
        %814 = vmatpush2.msra.mxu0 0.0
        %815 = vmatprep.subr.mxu0 0.0
        %816 = vmatpush2.msra.mxu0 0.0
        %817 = vmatprep.subr.mxu0 0.0
        %818 = vmatpush2.msra.mxu0 0.0
        %819 = vmatprep.subr.mxu0 0.0
        %820 = vmatpush2.msra.mxu0 0.0
        %821 = vmatprep.mubr.f32.mxu0 0.0
        %822 = vmatmul.mubr.f32.gmra.mxu0 %v755
        %v823 = vpop.f32.mrf.mxu0
        %v824 = vadd.f32 0.0, %v823
        %v825 = vpop.f32.mrf.mxu0
        %826 = vdwg.mxu0
        %p827 = scmp.eq.s32.totalorder %s33, 0
        // Predicated region
        $region53: #{tpu_custom_call.1} parent=39 // pred_check
          %p828 = pneg %p827
        $region54: #{tpu_custom_call.1} parent=39 // pred_check_branch
          %830 = sbr.rel (%p828) target = $region56
        $region55: #{tpu_custom_call.1} parent=39 // pred_region
          %831 = vst.msk [vmem:[#allocation2] sm:$0xff] %vm337, %v824
        $region56: #{tpu_custom_call.1} parent=39 // pred_fallthru
          _
        %p832 = scmp.ne.s32.totalorder %s33, 0
        // Predicated region
        $region57: #{tpu_custom_call.1} parent=39 // pred_check
          %p833 = pneg %p832
        $region58: #{tpu_custom_call.1} parent=39 // pred_check_branch
          %835 = sbr.rel (%p833) target = $region60
        $region59: #{tpu_custom_call.1} parent=39 // pred_region
          %v836 = vld [vmem:[#allocation2] sm:$0xff]
          %v837 = vadd.f32 %v836, %v824
          %838 = vst.msk [vmem:[#allocation2] sm:$0xff] %vm337, %v837
        $region60: #{tpu_custom_call.1} parent=39 // pred_fallthru
          _
        %p839 = scmp.eq.s32.totalorder %s33, 1
        // Predicated region
        $region61: #{tpu_custom_call.1} parent=39 // pred_check
          %p840 = pneg %p839
        $region62: #{tpu_custom_call.1} parent=39 // pred_check_branch
          %842 = sbr.rel (%p840) target = $region64
        $region63: #{tpu_custom_call.1} parent=39 // pred_region
          %v843 = vld [vmem:[#allocation2] sm:$0xff]
          %v844 = vld [vmem:[%s4] sm:$0x1]
          %v846 = vlaneseq
          %v847 = vshrl.u32 %v846, 7
          %v848 = vsub.s32 0, %v847
          %v849 = vrot.slane %v844, %v848
          %v851 = vadd.f32 %v843, %v849
          %852 = vst.msk [vmem:[%s313] sm:$0xff] %vm337, %v851
        $region64: #{tpu_custom_call.1} parent=39 // pred_fallthru
          _
        %s853 = sand.u32 %s158, 1
        %s854 = scalar_lea.sflag [#allocation5], %s853
        %s855 = sand.u32 %s158, 1
        %s856 = smul.addr %s855, 8
        %s857 = scalar_lea.vmem [#allocation9], %s856
        %s858 = sand.u32 %s186, 1
        %s859 = scalar_lea.sflag [#allocation11], %s858
        %s860 = sand.u32 %s186, 1
        %s861 = smul.addr %s860, 16
        %s862 = scalar_lea.vmem [#allocation10], %s861
        // Predicated region
        $region65: #{tpu_custom_call.1} parent=39 // pred_check
          %p863 = pneg %p168
        $region66: #{tpu_custom_call.1} parent=39 // pred_check_branch
          %865 = sbr.rel (%p863) target = $region68
        $region67: #{tpu_custom_call.1} parent=39 // pred_region
          %s867 = ssub.s32 128, 128
          %868 = vsyncadd %s854, %s867
          %s869 = smul.addr %s32, 128
          %s870 = scalar_lea.hbm %s5, %s869
          %s872 = sshll.u32 %s857, 4
          %s873 = int_to_ptr.vmem [resolvable:$true] %s872
          %875 = dma.vmem_to_hbm [thread:$0]  %s873, 128, %s870, %s854
        $region68: #{tpu_custom_call.1} parent=39 // pred_fallthru
          _
        // Predicated region
        $region69: #{tpu_custom_call.1} parent=39 // pred_check
          %p876 = pneg %p196
        $region70: #{tpu_custom_call.1} parent=39 // pred_check_branch
          %878 = sbr.rel (%p876) target = $region72
        $region71: #{tpu_custom_call.1} parent=39 // pred_region
          %s879 = smul.u32 2, %s33
          %s881 = ssub.s32 256, 256
          %882 = vsyncadd %s859, %s881
          %s883 = smul.addr %s32, 4
          %s884 = sadd.s32 %s879, %s883
          %s885 = smul.addr %s884, 128
          %s886 = scalar_lea.hbm %s6, %s885
          %s887 = sshll.u32 %s862, 4
          %s888 = int_to_ptr.vmem [resolvable:$true] %s887
          %893 = dma.vmem_to_hbm [thread:$0]  %s888, 256, %s886, %s859, 128, 128, 8
        $region72: #{tpu_custom_call.1} parent=39 // pred_fallthru
          _
      $region40: #{tpu_custom_call.1} parent=5 // pred_fallthru
        _
      %p894 = scmp.le.s32.totalorder 2, %s23
      // Predicated region
      $region73: #{tpu_custom_call.1} parent=5 // pred_check
        %p895 = pneg %p894
      $region74: #{tpu_custom_call.1} parent=5 // pred_check_branch
        %897 = sbr.rel (%p895) target = $region76
      $region75: #{tpu_custom_call.1} parent=5 // pred_region
        %s898 = ssub.s32 %s23, 2
        // Predicated region
        $region77: #{tpu_custom_call.1} parent=75 // pred_check
          %p899 = pneg %p174
        $region78: #{tpu_custom_call.1} parent=75 // pred_check_branch
          %901 = sbr.rel (%p899) target = $region80
        $region79: #{tpu_custom_call.1} parent=75 // pred_region
          %s902 = sand.u32 %s159, 1
          %s903 = scalar_lea.sflag [#allocation5], %s902
          %s904 = sand.u32 %s159, 1
          %s905 = smul.addr %s904, 8
          %s906 = scalar_lea.vmem [#allocation9], %s905
          %907 = dma.done %s903, 128
        $region80: #{tpu_custom_call.1} parent=75 // pred_fallthru
          _
        // Predicated region
        $region81: #{tpu_custom_call.1} parent=75 // pred_check
          %p908 = pneg %p202
        $region82: #{tpu_custom_call.1} parent=75 // pred_check_branch
          %910 = sbr.rel (%p908) target = $region84
        $region83: #{tpu_custom_call.1} parent=75 // pred_region
          %s911 = sand.u32 %s187, 1
          %s912 = scalar_lea.sflag [#allocation11], %s911
          %s913 = sand.u32 %s187, 1
          %s914 = smul.addr %s913, 16
          %s915 = scalar_lea.vmem [#allocation10], %s914
          %916 = dma.done %s912, 256
        $region84: #{tpu_custom_call.1} parent=75 // pred_fallthru
          _
      $region76: #{tpu_custom_call.1} parent=5 // pred_fallthru
        _
    $region6: #{tpu_custom_call.1} parent=1 // loop_footer
      %s27 = sadd.s32 1, %s23
    $region7: #{tpu_custom_call.1} parent=1 // loop_footer_branch
      %22 = sbr.rel target = $region3
    $region8: #{tpu_custom_call.1} parent=1 // loop_exit
      _
    %917 = vsyncpa [#allocation4], 1
    %s918 = scalar_lea.sflag [#allocation4], 1
    %919 = vsyncpa %s918, 1
    %920 = vsyncpa [#allocation7], 1
    %921 = vsyncpa [#allocation5], 1
    %s922 = scalar_lea.sflag [#allocation5], 1
    %923 = vsyncpa %s922, 1
    %924 = vsyncpa [#allocation11], 1
    %s925 = scalar_lea.sflag [#allocation11], 1
    %926 = vsyncpa %s925, 1

</llo_original>
